<compile_context>
chip_gen: v7x
topology: tpu7x:2x2x1
jax: 0.10.0
libtpu: 0.0.40
codegen_flags: <defaults>
</compile_context>

<pallas_src>
import jax
import jax.numpy as jnp
from jax.experimental import pallas as pl
from jax.experimental.pallas import tpu as pltpu


def _round_up(x, m):
    return ((x + m - 1) // m) * m


def _make_focal_kernel(gamma: float, n_true: int, tn: int):
    gamma = float(gamma)

    def kernel(logits_ref, tgt_ref, alphat_ref, out_ref):
        i = pl.program_id(0)
        x = logits_ref[...]                               # (TN, C), native dtype
        tgt = tgt_ref[...]                                # (TN, 1) int32
        TN, C = x.shape

        # one-hot of target along the class (lane) axis
        col = jax.lax.broadcasted_iota(jnp.int32, (TN, C), 1)
        onehot = col == tgt                               # (TN, C) bool

        # numerically-stable log-softmax pieces (f32 math; bf16 input upcast here)
        xf = x.astype(jnp.float32)
        row_max = jnp.max(xf, axis=-1, keepdims=True)                     # (TN, 1)
        lse = jnp.log(jnp.sum(jnp.exp(xf - row_max), axis=-1,
                              keepdims=True)) + row_max                   # (TN, 1)
        tgt_logit = jnp.sum(jnp.where(onehot, xf, 0.0), axis=-1,
                            keepdims=True)                                # (TN, 1)
        nll = lse - tgt_logit          # unweighted -log p_t, per sample (TN, 1)

        if gamma == 0.0:
            per_sample = nll                      # F.cross_entropy, no weights
        else:
            alphat = alphat_ref[...].astype(jnp.float32)  # (TN, 1), w[target]
            wce = alphat * nll                    # weighted CE, reduction='none'
            pt = jnp.exp(-nll)                    # == exp(-wce/alphat); alphat cancels
            one_m_pt = jnp.maximum(1.0 - pt, 0.0)
            g_int = int(gamma)
            if float(g_int) == gamma and 0 < g_int <= 8:
                f = one_m_pt                      # integer gamma: repeated multiply,
                for _ in range(g_int - 1):        # no exp/log pow on the EUP
                    f = f * one_m_pt
            else:
                f = one_m_pt ** gamma
            per_sample = f * wce

        # ragged last tile: rows >= true N hold unspecified data -> select, not
        # multiply, so garbage NaN/Inf cannot propagate into the reduction.
        row = jax.lax.broadcasted_iota(jnp.int32, (TN, 1), 0) + i * tn
        per_sample = jnp.where(row < n_true, per_sample, 0.0)

        partial = jnp.sum(per_sample)
        out_ref[...] = jnp.broadcast_to(partial, out_ref.shape).astype(jnp.float32)

    return kernel


def focal_loss(logits, target, class_counts, gamma: float = 0.0,
               vmem_budget_bytes: int = 20 * 1024 * 1024):
    """logits: (N, C) float (f32 or bf16), target: (N,) int, class_counts: (C,) float."""
    N, C = logits.shape
    gamma = float(gamma)

    # Class weights + per-sample gather, computed once in plain JAX (O(C) + O(N)).
    cc = class_counts.astype(jnp.float32)
    w = jnp.where(cc == 0.0, jnp.inf, cc)
    w = 1.0 / w
    w = w / jnp.sum(w)
    w = jnp.where(w == 0.0, 1e-5, w)
    tgt_i32 = target.astype(jnp.int32)
    alphat = jnp.take(w, tgt_i32, axis=0).reshape(N, 1)     # (N, 1) f32
    tgt_col = tgt_i32.reshape(N, 1)                         # (N, 1) int32

    # Tile rows from a VMEM budget: double-buffered native-dtype logits tile plus
    # the in-kernel f32 temporaries.  ~20 MiB target is safe on v5e/v6e (128 MiB
    # physical) and on v7x (64 MiB physical / 32 MiB scoped default).
    itemsize = jnp.dtype(logits.dtype).itemsize
    per_row = 2 * C * itemsize + 3 * C * 4 + 128
    tn = max(8, (vmem_budget_bytes // per_row) // 8 * 8)
    tn = min(tn, 4096, _round_up(N, 8))
    G = pl.cdiv(N, tn)

    cost = pl.CostEstimate(
        flops=int(6 * N * C),
        transcendentals=int(N * C + 3 * N),
        bytes_accessed=int(N * C * itemsize + 2 * N * 4 + G * 128 * 4),
    )

    out = pl.pallas_call(
        _make_focal_kernel(gamma, N, tn),
        out_shape=jax.ShapeDtypeStruct((G, 1, 128), jnp.float32),
        grid_spec=pltpu.PrefetchScalarGridSpec(
            num_scalar_prefetch=0,
            grid=(G,),
            in_specs=[
                pl.BlockSpec((tn, C), lambda i: (i, 0)),    # logits tile, full class dim
                pl.BlockSpec((tn, 1), lambda i: (i, 0)),    # targets column
                pl.BlockSpec((tn, 1), lambda i: (i, 0)),    # alphat = w[target] column
            ],
            out_specs=pl.BlockSpec((1, 1, 128), lambda i: (i, 0, 0)),
        ),
        compiler_params=pltpu.CompilerParams(
            # TODO(synk): switch to pltpu.CORE_PARALLEL on v7x to explicitly
            # shard independent N-tiles across its 2 TensorCores.
            dimension_semantics=("parallel",),
            vmem_limit_bytes=32 * 1024 * 1024,
        ),
        cost_estimate=cost,
    )(logits, tgt_col, alphat)

    # Tiny final reduction of per-tile partial sums; divide by the true N.
    return jnp.sum(out[:, 0, 0]) / N


def _focal_loss_ref(logits, target, class_counts, gamma):
    """Pure-JAX reference mirroring the PyTorch module."""
    x = logits.astype(jnp.float32)
    lse = jax.scipy.special.logsumexp(x, axis=-1)
    tgt_logit = jnp.take_along_axis(x, target[:, None].astype(jnp.int32), axis=-1)[:, 0]
    nll = lse - tgt_logit
    if gamma == 0.0:
        return jnp.mean(nll)
    cc = class_counts.astype(jnp.float32)
    w = jnp.where(cc == 0.0, jnp.inf, cc)
    w = 1.0 / w
    w = w / jnp.sum(w)
    w = jnp.where(w == 0.0, 1e-5, w)
    alphat = w[target]
    wce = alphat * nll
    pt = jnp.exp(-nll)
    return jnp.mean((1.0 - pt) ** gamma * wce)


if __name__ == "__main__":
    key = jax.random.PRNGKey(0)
    k1, k2, k3 = jax.random.split(key, 3)

    N, C = 8, 32  # batch of 8 samples, 32 classes
    logits = jax.random.normal(k1, (N, C), dtype=jnp.float32)
    target = jax.random.randint(k2, (N,), 0, C, dtype=jnp.int32)
    # class counts with some zeros to exercise the inf / 1e-5 handling
    class_counts = jax.random.randint(k3, (C,), 0, 6).astype(jnp.float32)

    # gamma == 0 path (plain mean cross-entropy), f32 logits
    loss_ce = focal_loss(logits, target, class_counts, gamma=0.0)
    # gamma != 0 path (focal loss), f32 logits
    loss_focal = focal_loss(logits, target, class_counts, gamma=2.0)
    # bf16 logits DMA'd natively (no wrapper upcast) — exercises the bandwidth path
    loss_focal_bf16 = focal_loss(logits.astype(jnp.bfloat16), target,
                                 class_counts, gamma=2.0)
    jax.block_until_ready((loss_ce, loss_focal, loss_focal_bf16))

    # correctness sanity-check against the pure-JAX reference
    ref_ce = _focal_loss_ref(logits, target, class_counts, 0.0)
    ref_focal = _focal_loss_ref(logits, target, class_counts, 2.0)
    assert jnp.allclose(loss_ce, ref_ce, rtol=1e-4, atol=1e-5), (loss_ce, ref_ce)
    assert jnp.allclose(loss_focal, ref_focal, rtol=1e-4, atol=1e-5), (loss_focal, ref_focal)

    print("KERNEL_OK")
</pallas_src>

<mosaic_0001>
module attributes {stable_mosaic.version = 11 : i64} {
  func.func @kernel(%arg0: i32, %arg1: memref<8x32xf32, #tpu.memory_space<vmem>>, %arg2: memref<8x1xi32, #tpu.memory_space<vmem>>, %arg3: memref<8x1xf32, #tpu.memory_space<vmem>>, %arg4: memref<1x1x128xf32, #tpu.memory_space<vmem>>) attributes {dimension_semantics = [#tpu.dimension_semantics<parallel>], iteration_bounds = array<i64: 1>, scalar_prefetch = 0 : i64, scratch_operands = 0 : i64, tpu.core_type = #tpu.core_type<tc>, window_params = [{transform_indices = @transform_0, window_bounds = array<i64: 8, 32>}, {transform_indices = @transform_1, window_bounds = array<i64: 8, 1>}, {transform_indices = @transform_2, window_bounds = array<i64: 8, 1>}, {transform_indices = @transform_3, window_bounds = array<i64: 1, 1, 128>}]} {
    %c0 = arith.constant 0 : index
    %c0_0 = arith.constant 0 : index
    %0 = vector.load %arg1[%c0, %c0_0] : memref<8x32xf32, #tpu.memory_space<vmem>>, vector<8x32xf32>
    %c0_1 = arith.constant 0 : index
    %c0_2 = arith.constant 0 : index
    %1 = vector.load %arg2[%c0_1, %c0_2] : memref<8x1xi32, #tpu.memory_space<vmem>>, vector<8x1xi32>
    %2 = tpu.iota {dimensions = array<i32: 1>} : vector<8x32xi32>
    %3 = vector.broadcast %1 : vector<8x1xi32> to vector<8x32xi32>
    %4 = arith.cmpi eq, %2, %3 : vector<8x32xi32>
    %cst = arith.constant dense<0xFF800000> : vector<8xf32>
    %5 = vector.multi_reduction <maximumf>, %0, %cst [1] : vector<8x32xf32> to vector<8xf32>
    %6 = vector.shape_cast %5 : vector<8xf32> to vector<8x1xf32>
    %7 = vector.broadcast %6 : vector<8x1xf32> to vector<8x32xf32>
    %8 = arith.subf %0, %7 : vector<8x32xf32>
    %9 = math.exp %8 : vector<8x32xf32>
    %cst_3 = arith.constant dense<0.000000e+00> : vector<8xf32>
    %10 = vector.multi_reduction <add>, %9, %cst_3 [1] : vector<8x32xf32> to vector<8xf32>
    %11 = vector.shape_cast %10 : vector<8xf32> to vector<8x1xf32>
    %12 = math.log %11 : vector<8x1xf32>
    %13 = arith.addf %12, %6 : vector<8x1xf32>
    %cst_4 = arith.constant 0.000000e+00 : f32
    %14 = vector.broadcast %cst_4 : f32 to vector<8x32xf32>
    %15 = arith.select %4, %0, %14 : vector<8x32xi1>, vector<8x32xf32>
    %cst_5 = arith.constant dense<0.000000e+00> : vector<8xf32>
    %16 = vector.multi_reduction <add>, %15, %cst_5 [1] : vector<8x32xf32> to vector<8xf32>
    %17 = vector.shape_cast %16 : vector<8xf32> to vector<8x1xf32>
    %18 = arith.subf %13, %17 : vector<8x1xf32>
    %19 = tpu.iota {dimensions = array<i32: 0>} : vector<8x1xi32>
    %c8_i32 = arith.constant 8 : i32
    %20 = arith.muli %arg0, %c8_i32 : i32
    %21 = vector.broadcast %20 : i32 to vector<8x1xi32>
    %22 = arith.addi %19, %21 : vector<8x1xi32>
    %c8_i32_6 = arith.constant 8 : i32
    %23 = vector.broadcast %c8_i32_6 : i32 to vector<8x1xi32>
    %24 = arith.cmpi slt, %22, %23 : vector<8x1xi32>
    %cst_7 = arith.constant 0.000000e+00 : f32
    %25 = vector.broadcast %cst_7 : f32 to vector<8x1xf32>
    %26 = arith.select %24, %18, %25 : vector<8x1xi1>, vector<8x1xf32>
    %27 = vector.shape_cast %26 : vector<8x1xf32> to vector<1x8x1xf32>
    %cst_8 = arith.constant dense<0.000000e+00> : vector<1xf32>
    %28 = vector.multi_reduction <add>, %27, %cst_8 [1, 2] : vector<1x8x1xf32> to vector<1xf32>
    %29 = vector.shape_cast %28 : vector<1xf32> to vector<1x1x1xf32>
    %30 = vector.extract %29[0, 0, 0] : f32 from vector<1x1x1xf32>
    %31 = vector.broadcast %30 : f32 to vector<1x1x128xf32>
    %c0_9 = arith.constant 0 : index
    %c0_10 = arith.constant 0 : index
    %c0_11 = arith.constant 0 : index
    %32 = vector.load %arg4[%c0_9, %c0_10, %c0_11] : memref<1x1x128xf32, #tpu.memory_space<vmem>>, vector<1x1x128xf32>
    tpu.vector_store %arg4[%c0_9, %c0_10, %c0_11], %31 {strides = array<i32>} : memref<1x1x128xf32, #tpu.memory_space<vmem>>, vector<1x1x128xf32>,
    return
  }
  func.func @transform_0(%arg0: i32) -> (i32, i32) {
    %c0_i32 = arith.constant 0 : i32
    %c0_i32_0 = arith.constant 0 : i32
    return %arg0, %c0_i32 : i32, i32
  }
  func.func @transform_1(%arg0: i32) -> (i32, i32) {
    %c0_i32 = arith.constant 0 : i32
    %c0_i32_0 = arith.constant 0 : i32
    return %arg0, %c0_i32 : i32, i32
  }
  func.func @transform_2(%arg0: i32) -> (i32, i32) {
    %c0_i32 = arith.constant 0 : i32
    %c0_i32_0 = arith.constant 0 : i32
    return %arg0, %c0_i32 : i32, i32
  }
  func.func @transform_3(%arg0: i32) -> (i32, i32, i32) {
    %c0_i32 = arith.constant 0 : i32
    %c0_i32_0 = arith.constant 0 : i32
    %c0_i32_1 = arith.constant 0 : i32
    return %arg0, %c0_i32, %c0_i32_0 : i32, i32, i32
  }
}

</mosaic_0001>

<llo_original>
// kernel: tpu_custom_call.1
$region0: #{tpu_custom_call.1}
  #allocation0 [shape = 'u32[]', space=smem, size = 0x4, offset = 0x4, fixed_abs, tag = 'smem constant byte address 0x4 - core index']
  #allocation1 [shape = 'u32[144,128]{1,0:T(1,128)}', space=vmem, size = 0x12000, scoped, tag = 'internal scratch']
  %s0 = inlined_call_operand.vmem [shape: f32[8,32], index: 0, kind: input, shape index: {}]
  %s1 = inlined_call_operand.vmem [shape: s32[8,1], index: 1, kind: input, shape index: {}]
  %s2 = inlined_call_operand.vmem [shape: f32[8,1], index: 2, kind: input, shape index: {}]
  %s3 = inlined_call_operand.hbm [shape: f32[1,1,128], index: 3, kind: output, shape index: {}]
  %s4 = sld [smem:[#allocation0]]
  $region22: #{tpu_custom_call.1} parent=0
    _
  %s6 = ssub.s32 1, %s4
  %s7 = scalar_select 0, %s6, %s4
  $region1: #{tpu_custom_call.1} parent=0
    #allocation2 [shape = 'u8[512]{0}', space=vmem, size = 0x400, scoped, tag = 'output window, operand 0, single buffered']
    #allocation3 [shape = 's32[1]{0}', space=sflag, size = 0x4, scoped, tag = 'scoped memory for tpu_custom_call.1']
    %8 = vsyncpa [#allocation3], 0
    // Predicated region
    $region2: #{tpu_custom_call.1} parent=1 // pred_check
      _
    $region3: #{tpu_custom_call.1} parent=1 // pred_check_branch
      %10 = sbr.rel (0) target = $region5
    $region4: #{tpu_custom_call.1} parent=1 // pred_region
      _
    $region5: #{tpu_custom_call.1} parent=1 // pred_fallthru
      _
    // Predicated region
    $region6: #{tpu_custom_call.1} parent=1 // pred_check
      _
    $region7: #{tpu_custom_call.1} parent=1 // pred_check_branch
      %12 = sbr.rel (0) target = $region9
    $region8: #{tpu_custom_call.1} parent=1 // pred_region
      _
    $region9: #{tpu_custom_call.1} parent=1 // pred_fallthru
      _
    // Predicated region
    $region10: #{tpu_custom_call.1} parent=1 // pred_check
      _
    $region11: #{tpu_custom_call.1} parent=1 // pred_check_branch
      %14 = sbr.rel (0) target = $region13
    $region12: #{tpu_custom_call.1} parent=1 // pred_region
      _
    $region13: #{tpu_custom_call.1} parent=1 // pred_fallthru
      _
    %v15 = vld [vmem:[%s0] sm:$0xff]
    %v16 = vld [vmem:[%s1] sm:$0xff]
    %v17 = vlaneseq
    %v18 = vand.u32 %v17, 127
    %19 = vset.pattern.permute.xlu0 0
    %20 = vperm.xlu0 %19, %v16
    %v21 = vpop.permute.xlu0 %20
    %vm22 = vcmp.eq.s32.totalorder %v18, %v21
    %vm23 = vcmask 261120
    %v24 = vsel %vm23, %v15, -inf
    %25 = vmax.xlane.f32.xlu0 %v24
    %v26 = vpop.xlane.xlu0 %25
    %v27 = vsub.f32 %v15, %v26
    %v28 = vmul.f32 %v27, 1.442695
    %v29 = vpow.pop %v28
    %v30 = vsel %vm23, %v29, 0.0
    %31 = vadd.xlane.f32.xlu0 %v30
    %v32 = vpop.xlane.xlu0 %31
    %v33 = vlog2.pop %v32
    %v34 = vmul.f32 %v33, 0.6931472
    %v35 = vadd.f32 %v34, %v26
    %v36 = vsel %vm22, %v15, 0.0
    %v37 = vsel %vm23, %v36, 0.0
    %38 = vadd.xlane.f32.xlu0 %v37
    %v39 = vpop.xlane.xlu0 %38
    %v40 = vsub.f32 %v35, %v39
    %v41 = vlaneseq
    %v42 = vshrl.u32 %v41, 7
    %s43 = smul.u32 0, 8
    %v44 = vstv %s43
    %v45 = vadd.s32 %v42, %v44
    %vm46 = vcmp.lt.s32.totalorder %v45, 8
    %v47 = vsel %vm46, %v40, 0.0
    %vm48 = vcmask 7168
    %v49 = vsel %vm48, %v47, 0.0
    %50 = vadd.xlane.f32.xlu0 %v49
    %v51 = vpop.xlane.xlu0 %50
    %v52 = vrot.slane %v51, 4
    %v53 = vadd.f32 %v51, %v52
    %v54 = vrot.slane %v53, 2
    %v55 = vadd.f32 %v53, %v54
    %v56 = vrot.slane %v55, 1
    %v57 = vadd.f32 %v55, %v56
    %s58 = vtos %v57
    %v59 = vstv %s58
    %60 = vst [vmem:[#allocation2] sm:$0x1] %v59
    // Predicated region
    $region14: #{tpu_custom_call.1} parent=1 // pred_check
      _
    $region15: #{tpu_custom_call.1} parent=1 // pred_check_branch
      %62 = sbr.rel (0) target = $region17
    $region16: #{tpu_custom_call.1} parent=1 // pred_region
      %s64 = ssub.s32 16, 16
      %65 = vsyncadd [#allocation3], %s64
      %s67 = sshll.u32 [#allocation2], 4
      %s68 = int_to_ptr.vmem [resolvable:$true] %s67
      %70 = dma.vmem_to_hbm [thread:$0]  %s68, 16, %s3, [#allocation3]
    $region17: #{tpu_custom_call.1} parent=1 // pred_fallthru
      _
    // Predicated region
    $region18: #{tpu_custom_call.1} parent=1 // pred_check
      _
    $region19: #{tpu_custom_call.1} parent=1 // pred_check_branch
      %72 = sbr.rel (0) target = $region21
    $region20: #{tpu_custom_call.1} parent=1 // pred_region
      %73 = dma.done [#allocation3], 16
    $region21: #{tpu_custom_call.1} parent=1 // pred_fallthru
      _
    %74 = vsyncpa [#allocation3], 1

</llo_original>
